<compile_context>
chip_gen: v6e
topology: v6e:2x2x1
jax: 0.10.0
libtpu: 0.0.40
codegen_flags: <defaults>
</compile_context>

<pallas_src>
import functools

import jax
import jax.numpy as jnp
from jax.experimental import pallas as pl
from jax.experimental.pallas import tpu as pltpu

LN_EPS = 1e-5  # nn.LayerNorm default


def _round_up(a, m):
    return (a + m - 1) // m * m


def _vmem_budget_bytes():
    """Scoped-VMEM budget: ~80% of physical per-core VMEM, with a safe fallback."""
    try:
        cap = pltpu.get_tpu_info().vmem_capacity_bytes
    except Exception:
        cap = 64 * 1024 * 1024  # v7x physical size; safe everywhere
    return int(cap * 0.8)


def _prenorm_linear_kernel(x_ref, g_ref, b_ref, w_ref, wb_ref, o_ref):
    # x_ref: (tile_rows, D) native dtype   g_ref/b_ref: (1, D) f32
    # w_ref: (D, tile_h) bf16              wb_ref: (1, tile_h) f32
    # o_ref: (tile_rows, tile_h) input dtype
    x = x_ref[...].astype(jnp.float32)

    # LayerNorm over the last dim (biased variance, like torch.nn.LayerNorm).
    # Single reduction pass, clamped at 0 to guard against cancellation.
    mean = jnp.mean(x, axis=-1, keepdims=True)
    mean_sq = jnp.mean(x * x, axis=-1, keepdims=True)
    var = jnp.maximum(mean_sq - mean * mean, 0.0)
    inv = jax.lax.rsqrt(var + LN_EPS)

    # Affine part of LayerNorm (f32 on the VPU).
    y = (x - mean) * inv * g_ref[...] + b_ref[...]

    # fn := Linear(dim -> hidden): bf16 MXU matmul, f32 accumulate, f32 bias.
    out = jnp.dot(y.astype(jnp.bfloat16), w_ref[...],
                  preferred_element_type=jnp.float32) + wb_ref[...]
    o_ref[...] = out.astype(o_ref.dtype)


@functools.partial(jax.jit, static_argnames=("tile_rows",))
def prenorm_linear(x, gamma, beta, w, wb, *, tile_rows=512):
    """x: (B, S, D) -> (B, S, H). Fused LayerNorm + Linear via Pallas."""
    B, S, D = x.shape
    H = w.shape[1]
    rows = B * S
    out_dtype = x.dtype

    budget = _vmem_budget_bytes()
    xb = jnp.dtype(x.dtype).itemsize
    ob = jnp.dtype(out_dtype).itemsize

    # Row tile: multiple of 8 sublanes, clamped to the problem size.
    tile_rows = max(8, min(tile_rows, _round_up(rows, 8)))

    def footprint(tr, th):
        # Double-buffered operand/output tiles + rough in-kernel f32 temps.
        buf = 2 * (tr * D * xb + D * th * 2 + tr * th * ob) + 2 * (D + th) * 4
        tmp = tr * D * (4 + 4 + 2) + tr * th * 4
        return buf + tmp

    # ---- schedule selection -------------------------------------------------
    # Prefer the resident-W schedule: x streamed once, LN computed once/row.
    min_tr = min(tile_rows, max(8, min(128, _round_up(rows, 8))))
    tr = tile_rows
    resident_tr = None
    while True:
        if footprint(tr, H) <= budget:
            resident_tr = tr
            break
        if tr <= min_tr:
            break
        tr = max(min_tr, tr // 2)

    if resident_tr is not None:
        tile_rows = resident_tr
        tile_h = H
        H_p = H
    else:
        # Weight-tiled fallback: pick the largest lane-dense H tile that keeps
        # the per-step footprint under budget (bigger on v5e/v6e's 128 MiB,
        # smaller on v7x's 64 MiB) so flops per streamed x byte stay above the
        # HBM roofline.
        tile_h = 256
        for th in (2048, 1024, 512, 256):
            if th <= H and footprint(tile_rows, th) <= budget:
                tile_h = th
                break
        tile_h = min(tile_h, H)
        while footprint(tile_rows, tile_h) > budget and tile_rows > 8:
            tile_rows = max(8, tile_rows // 2)
        H_p = _round_up(H, tile_h)
        # TODO(synk): mirrored row-outer schedule with a cached pre-normalized
        # y tile (LN once per row) when the activation slab is smaller than W.

    rows_p = _round_up(rows, tile_rows)

    # ---- operands (native dtypes, pad only when ragged) ----------------------
    x2 = x.reshape(rows, D)                       # upcast happens in-kernel
    if rows_p != rows:
        x2 = jnp.pad(x2, ((0, rows_p - rows), (0, 0)))

    w2 = w if w.dtype == jnp.bfloat16 else w.astype(jnp.bfloat16)
    wb2 = wb.astype(jnp.float32).reshape(1, H)
    if H_p != H:
        w2 = jnp.pad(w2, ((0, 0), (0, H_p - H)))
        wb2 = jnp.pad(wb2, ((0, 0), (0, H_p - H)))

    g2 = gamma.astype(jnp.float32).reshape(1, D)
    b2 = beta.astype(jnp.float32).reshape(1, D)

    # ---- grid / specs ---------------------------------------------------------
    if resident_tr is not None:
        grid = (rows_p // tile_rows,)
        in_specs = [
            pl.BlockSpec((tile_rows, D), lambda i: (i, 0)),   # x rows
            pl.BlockSpec((1, D), lambda i: (0, 0)),           # gamma
            pl.BlockSpec((1, D), lambda i: (0, 0)),           # beta
            pl.BlockSpec((D, H), lambda i: (0, 0)),           # W (resident)
            pl.BlockSpec((1, H), lambda i: (0, 0)),           # bias (resident)
        ]
        out_specs = pl.BlockSpec((tile_rows, H), lambda i: (i, 0))
        dims = ("parallel",)                                  # shard rows on v7x
    else:
        # Weight-stationary ordering: H outer, rows inner (W block constant
        # across the inner loop -> no re-DMA of W within an H tile).
        grid = (H_p // tile_h, rows_p // tile_rows)
        in_specs = [
            pl.BlockSpec((tile_rows, D), lambda j, i: (i, 0)),
            pl.BlockSpec((1, D), lambda j, i: (0, 0)),
            pl.BlockSpec((1, D), lambda j, i: (0, 0)),
            pl.BlockSpec((D, tile_h), lambda j, i: (0, j)),
            pl.BlockSpec((1, tile_h), lambda j, i: (0, j)),
        ]
        out_specs = pl.BlockSpec((tile_rows, tile_h), lambda j, i: (i, j))
        # Rows (not H) get sharded across v7x's two TensorCores so each core
        # reads half of x; neutral on single-TC v5e/v6e.
        dims = ("arbitrary", "parallel")

    out2 = pl.pallas_call(
        _prenorm_linear_kernel,
        out_shape=jax.ShapeDtypeStruct((rows_p, H_p), out_dtype),
        grid_spec=pltpu.PrefetchScalarGridSpec(
            num_scalar_prefetch=0,
            grid=grid,
            in_specs=in_specs,
            out_specs=out_specs,
        ),
        compiler_params=pltpu.CompilerParams(
            dimension_semantics=dims,
            vmem_limit_bytes=budget,
        ),
    )(x2, g2, b2, w2, wb2)

    # Slice only when padding was actually applied (otherwise it's a free reshape).
    if rows_p != rows or H_p != H:
        out2 = out2[:rows, :H]
    return out2.reshape(B, S, H)


def reference(x, gamma, beta, w, wb):
    x = x.astype(jnp.float32)
    mean = jnp.mean(x, axis=-1, keepdims=True)
    var = jnp.mean((x - mean) ** 2, axis=-1, keepdims=True)
    xn = (x - mean) / jnp.sqrt(var + LN_EPS)
    y = xn * gamma + beta
    return jnp.einsum("bsd,dh->bsh", y, w.astype(jnp.float32)) + wb


if __name__ == "__main__":
    # Small shapes consistent with the module: (batch, seq, dim) -> hidden.
    B, S, D, H = 2, 8, 64, 128

    key = jax.random.PRNGKey(0)
    kx, kw, kb = jax.random.split(key, 3)

    x = jax.random.normal(kx, (B, S, D), dtype=jnp.float32)

    # LayerNorm params: nn.LayerNorm default init (weight=1, bias=0).
    gamma = jnp.ones((D,), dtype=jnp.float32)
    beta = jnp.zeros((D,), dtype=jnp.float32)

    # fn = Linear(D, H): deterministic synthetic weights, stored in bf16 once
    # (outside the jitted forward) so no per-call convert pass is emitted.
    w_f32 = jax.random.normal(kw, (D, H), dtype=jnp.float32) * 0.05
    w = w_f32.astype(jnp.bfloat16)
    wb = jax.random.normal(kb, (H,), dtype=jnp.float32) * 0.05

    out = prenorm_linear(x, gamma, beta, w, wb)
    out = jax.block_until_ready(out)

    ref = reference(x, gamma, beta, w_f32, wb)
    assert out.shape == (B, S, H)
    # bf16 MXU inputs -> compare against the f32 reference with a looser tol.
    assert jnp.allclose(out.astype(jnp.float32), ref, atol=2e-2, rtol=2e-2), \
        "mismatch vs reference"

    print("KERNEL_OK")
</pallas_src>

<mosaic_0001>
module attributes {stable_mosaic.version = 11 : i64} {
  func.func @_prenorm_linear_kernel(%arg0: i32, %arg1: memref<16x64xf32, #tpu.memory_space<vmem>>, %arg2: memref<1x64xf32, #tpu.memory_space<vmem>>, %arg3: memref<1x64xf32, #tpu.memory_space<vmem>>, %arg4: memref<64x128xbf16, #tpu.memory_space<vmem>>, %arg5: memref<1x128xf32, #tpu.memory_space<vmem>>, %arg6: memref<16x128xf32, #tpu.memory_space<vmem>>) attributes {dimension_semantics = [#tpu.dimension_semantics<parallel>], iteration_bounds = array<i64: 1>, scalar_prefetch = 0 : i64, scratch_operands = 0 : i64, tpu.core_type = #tpu.core_type<tc>, window_params = [{transform_indices = @transform_0, window_bounds = array<i64: 16, 64>}, {pipeline_mode = #tpu.pipeline_mode<synchronous>, transform_indices = @transform_1, window_bounds = array<i64: 1, 64>}, {pipeline_mode = #tpu.pipeline_mode<synchronous>, transform_indices = @transform_2, window_bounds = array<i64: 1, 64>}, {pipeline_mode = #tpu.pipeline_mode<synchronous>, transform_indices = @transform_3, window_bounds = array<i64: 64, 128>}, {pipeline_mode = #tpu.pipeline_mode<synchronous>, transform_indices = @transform_4, window_bounds = array<i64: 1, 128>}, {transform_indices = @transform_5, window_bounds = array<i64: 16, 128>}]} {
    %c0 = arith.constant 0 : index
    %c0_0 = arith.constant 0 : index
    %0 = vector.load %arg1[%c0, %c0_0] : memref<16x64xf32, #tpu.memory_space<vmem>>, vector<16x64xf32>
    %cst = arith.constant dense<0.000000e+00> : vector<16xf32>
    %1 = vector.multi_reduction <add>, %0, %cst [1] : vector<16x64xf32> to vector<16xf32>
    %2 = vector.shape_cast %1 : vector<16xf32> to vector<16x1xf32>
    %cst_1 = arith.constant 6.400000e+01 : f32
    %3 = vector.broadcast %cst_1 : f32 to vector<16x1xf32>
    %4 = arith.divf %2, %3 : vector<16x1xf32>
    %5 = arith.mulf %0, %0 : vector<16x64xf32>
    %cst_2 = arith.constant dense<0.000000e+00> : vector<16xf32>
    %6 = vector.multi_reduction <add>, %5, %cst_2 [1] : vector<16x64xf32> to vector<16xf32>
    %7 = vector.shape_cast %6 : vector<16xf32> to vector<16x1xf32>
    %cst_3 = arith.constant 6.400000e+01 : f32
    %8 = vector.broadcast %cst_3 : f32 to vector<16x1xf32>
    %9 = arith.divf %7, %8 : vector<16x1xf32>
    %10 = arith.mulf %4, %4 : vector<16x1xf32>
    %11 = arith.subf %9, %10 : vector<16x1xf32>
    %cst_4 = arith.constant 0.000000e+00 : f32
    %12 = vector.broadcast %cst_4 : f32 to vector<16x1xf32>
    %13 = arith.maximumf %11, %12 : vector<16x1xf32>
    %cst_5 = arith.constant 9.99999974E-6 : f32
    %14 = vector.broadcast %cst_5 : f32 to vector<16x1xf32>
    %15 = arith.addf %13, %14 : vector<16x1xf32>
    %16 = math.rsqrt %15 : vector<16x1xf32>
    %17 = vector.broadcast %4 : vector<16x1xf32> to vector<16x64xf32>
    %18 = arith.subf %0, %17 : vector<16x64xf32>
    %19 = vector.broadcast %16 : vector<16x1xf32> to vector<16x64xf32>
    %20 = arith.mulf %18, %19 : vector<16x64xf32>
    %c0_6 = arith.constant 0 : index
    %c0_7 = arith.constant 0 : index
    %21 = vector.load %arg2[%c0_6, %c0_7] : memref<1x64xf32, #tpu.memory_space<vmem>>, vector<1x64xf32>
    %22 = vector.broadcast %21 : vector<1x64xf32> to vector<16x64xf32>
    %23 = arith.mulf %20, %22 : vector<16x64xf32>
    %c0_8 = arith.constant 0 : index
    %c0_9 = arith.constant 0 : index
    %24 = vector.load %arg3[%c0_8, %c0_9] : memref<1x64xf32, #tpu.memory_space<vmem>>, vector<1x64xf32>
    %25 = vector.broadcast %24 : vector<1x64xf32> to vector<16x64xf32>
    %26 = arith.addf %23, %25 : vector<16x64xf32>
    %27 = arith.truncf %26 : vector<16x64xf32> to vector<16x64xbf16>
    %c0_10 = arith.constant 0 : index
    %c0_11 = arith.constant 0 : index
    %28 = vector.load %arg4[%c0_10, %c0_11] : memref<64x128xbf16, #tpu.memory_space<vmem>>, vector<64x128xbf16>
    %cst_12 = arith.constant dense<0.000000e+00> : vector<16x128xf32>
    %29 = tpu.matmul %27, %28, %cst_12 {dimension_numbers = #tpu.dot_dimension_numbers<[1], [0], [0], [1], [0, 0, 1, 1], [], []>} : vector<16x64xbf16>, vector<64x128xbf16>, vector<16x128xf32> -> vector<16x128xf32>
    %c0_13 = arith.constant 0 : index
    %c0_14 = arith.constant 0 : index
    %30 = vector.load %arg5[%c0_13, %c0_14] : memref<1x128xf32, #tpu.memory_space<vmem>>, vector<1x128xf32>
    %31 = vector.broadcast %30 : vector<1x128xf32> to vector<16x128xf32>
    %32 = arith.addf %29, %31 : vector<16x128xf32>
    %c0_15 = arith.constant 0 : index
    %c0_16 = arith.constant 0 : index
    %33 = vector.load %arg6[%c0_15, %c0_16] : memref<16x128xf32, #tpu.memory_space<vmem>>, vector<16x128xf32>
    tpu.vector_store %arg6[%c0_15, %c0_16], %32 {strides = array<i32>} : memref<16x128xf32, #tpu.memory_space<vmem>>, vector<16x128xf32>,
    return
  }
  func.func @transform_0(%arg0: i32) -> (i32, i32) {
    %c0_i32 = arith.constant 0 : i32
    %c0_i32_0 = arith.constant 0 : i32
    return %arg0, %c0_i32 : i32, i32
  }
  func.func @transform_1(%arg0: i32) -> (i32, i32) {
    %c0_i32 = arith.constant 0 : i32
    %c0_i32_0 = arith.constant 0 : i32
    %c0_i32_1 = arith.constant 0 : i32
    return %c0_i32, %c0_i32_0 : i32, i32
  }
  func.func @transform_2(%arg0: i32) -> (i32, i32) {
    %c0_i32 = arith.constant 0 : i32
    %c0_i32_0 = arith.constant 0 : i32
    %c0_i32_1 = arith.constant 0 : i32
    return %c0_i32, %c0_i32_0 : i32, i32
  }
  func.func @transform_3(%arg0: i32) -> (i32, i32) {
    %c0_i32 = arith.constant 0 : i32
    %c0_i32_0 = arith.constant 0 : i32
    %c0_i32_1 = arith.constant 0 : i32
    return %c0_i32, %c0_i32_0 : i32, i32
  }
  func.func @transform_4(%arg0: i32) -> (i32, i32) {
    %c0_i32 = arith.constant 0 : i32
    %c0_i32_0 = arith.constant 0 : i32
    %c0_i32_1 = arith.constant 0 : i32
    return %c0_i32, %c0_i32_0 : i32, i32
  }
  func.func @transform_5(%arg0: i32) -> (i32, i32) {
    %c0_i32 = arith.constant 0 : i32
    %c0_i32_0 = arith.constant 0 : i32
    return %arg0, %c0_i32 : i32, i32
  }
}

</mosaic_0001>

<llo_original>
// kernel: prenorm_linear.1
$region0: #{prenorm_linear.1}
  #allocation0 [shape = 'u32[]', space=smem, size = 0x4, offset = 0x4, fixed_abs, tag = 'smem constant byte address 0x4 - core index']
  #allocation1 [shape = 'u32[144,128]{1,0:T(1,128)}', space=vmem, size = 0x12000, scoped, tag = 'internal scratch']
  %s0 = inlined_call_operand.hbm [shape: f32[16,64], index: 0, kind: input, shape index: {}]
  %s1 = inlined_call_operand.vmem [shape: f32[1,64], index: 1, kind: input, shape index: {}]
  %s2 = inlined_call_operand.vmem [shape: f32[1,64], index: 2, kind: input, shape index: {}]
  %s3 = inlined_call_operand.hbm [shape: bf16[64,128], index: 3, kind: input, shape index: {}]
  %s4 = inlined_call_operand.vmem [shape: f32[1,128], index: 4, kind: input, shape index: {}]
  %s5 = inlined_call_operand.hbm [shape: f32[16,128], index: 5, kind: output, shape index: {}]
  %s6 = sld [smem:[#allocation0]]
  $region38: #{prenorm_linear.1} parent=0
    _
  %s8 = ssub.s32 1, %s6
  %s9 = scalar_select 0, %s8, %s6
  $region1: #{prenorm_linear.1} parent=0
    #allocation2 [shape = 'u8[8192]{0}', space=vmem, size = 0x2000, scoped, tag = 'input window, operand 0, single buffered']
    #allocation3 [shape = 's32[1]{0}', space=sflag, size = 0x4, scoped, tag = 'scoped memory for prenorm_linear.1']
    #allocation4 [shape = 's32[1]{0}', space=sflag, size = 0x4, scoped, tag = 'scoped memory for prenorm_linear.1']
    #allocation5 [shape = 'u8[16384]{0}', space=vmem, size = 0x4000, scoped, tag = 'input window, operand 3, single buffered']
    #allocation6 [shape = 's32[1]{0}', space=sflag, size = 0x4, scoped, tag = 'scoped memory for prenorm_linear.1']
    #allocation7 [shape = 'u8[8192]{0}', space=vmem, size = 0x2000, scoped, tag = 'output window, operand 0, single buffered']
    %10 = vsyncpa [#allocation3], 0
    %11 = vsyncpa [#allocation6], 0
    %12 = vsyncpa [#allocation4], 0
    // Predicated region
    $region2: #{prenorm_linear.1} parent=1 // pred_check
      _
    $region3: #{prenorm_linear.1} parent=1 // pred_check_branch
      %14 = sbr.rel (0) target = $region5
    $region4: #{prenorm_linear.1} parent=1 // pred_region
      %s16 = ssub.s32 256, 256
      %17 = vsyncadd [#allocation3], %s16
      %s18 = sshll.u32 [#allocation2], 4
      %s19 = int_to_ptr.vmem [resolvable:$true] %s18
      %24 = dma.hbm_to_vmem [thread:$0]  %s0, 256, %s19, [#allocation3], 128, 128, 8
    $region5: #{prenorm_linear.1} parent=1 // pred_fallthru
      _
    // Predicated region
    $region6: #{prenorm_linear.1} parent=1 // pred_check
      _
    $region7: #{prenorm_linear.1} parent=1 // pred_check_branch
      %26 = sbr.rel (0) target = $region9
    $region8: #{prenorm_linear.1} parent=1 // pred_region
      _
    $region9: #{prenorm_linear.1} parent=1 // pred_fallthru
      _
    // Predicated region
    $region10: #{prenorm_linear.1} parent=1 // pred_check
      _
    $region11: #{prenorm_linear.1} parent=1 // pred_check_branch
      %28 = sbr.rel (0) target = $region13
    $region12: #{prenorm_linear.1} parent=1 // pred_region
      _
    $region13: #{prenorm_linear.1} parent=1 // pred_fallthru
      _
    // Predicated region
    $region14: #{prenorm_linear.1} parent=1 // pred_check
      _
    $region15: #{prenorm_linear.1} parent=1 // pred_check_branch
      %30 = sbr.rel (0) target = $region17
    $region16: #{prenorm_linear.1} parent=1 // pred_region
      %s32 = ssub.s32 512, 512
      %33 = vsyncadd [#allocation6], %s32
      %s34 = sshll.u32 [#allocation5], 4
      %s35 = int_to_ptr.vmem [resolvable:$true] %s34
      %40 = dma.hbm_to_vmem [thread:$0]  %s3, 512, %s35, [#allocation6], 64, 64, 4
    $region17: #{prenorm_linear.1} parent=1 // pred_fallthru
      _
    // Predicated region
    $region18: #{prenorm_linear.1} parent=1 // pred_check
      _
    $region19: #{prenorm_linear.1} parent=1 // pred_check_branch
      %42 = sbr.rel (0) target = $region21
    $region20: #{prenorm_linear.1} parent=1 // pred_region
      _
    $region21: #{prenorm_linear.1} parent=1 // pred_fallthru
      _
    // Predicated region
    $region22: #{prenorm_linear.1} parent=1 // pred_check
      _
    $region23: #{prenorm_linear.1} parent=1 // pred_check_branch
      %44 = sbr.rel (0) target = $region25
    $region24: #{prenorm_linear.1} parent=1 // pred_region
      %45 = dma.done [#allocation3], 256
    $region25: #{prenorm_linear.1} parent=1 // pred_fallthru
      _
    // Predicated region
    $region26: #{prenorm_linear.1} parent=1 // pred_check
      _
    $region27: #{prenorm_linear.1} parent=1 // pred_check_branch
      %47 = sbr.rel (0) target = $region29
    $region28: #{prenorm_linear.1} parent=1 // pred_region
      %48 = dma.done [#allocation6], 512
    $region29: #{prenorm_linear.1} parent=1 // pred_fallthru
      _
    %v50 = vld [vmem:[#allocation2] sm:$0xff]
    %v51 = vld [vmem:[#allocation2 + $0x8] sm:$0xff]
    %vm52 = vcmask 523264
    %v53 = vsel %vm52, %v50, 0.0
    %54 = vadd.xlane.f32.xlu0 %v53
    %v55 = vpop.xlane.xlu0 %54
    %v56 = vsel %vm52, %v51, 0.0
    %57 = vadd.xlane.f32.xlu0 %v56
    %v58 = vpop.xlane.xlu0 %57
    %v59 = vrcp.pop 64.0
    %v60 = vmul.f32 %v55, %v59
    %v61 = vmul.f32 %v58, %v59
    %v62 = vmul.f32 %v50, %v50
    %v63 = vmul.f32 %v51, %v51
    %v64 = vsel %vm52, %v62, 0.0
    %65 = vadd.xlane.f32.xlu0 %v64
    %v66 = vpop.xlane.xlu0 %65
    %v67 = vsel %vm52, %v63, 0.0
    %68 = vadd.xlane.f32.xlu0 %v67
    %v69 = vpop.xlane.xlu0 %68
    %v70 = vmul.f32 %v66, %v59
    %v71 = vmul.f32 %v69, %v59
    %v72 = vmul.f32 %v60, %v60
    %v73 = vmul.f32 %v61, %v61
    %v74 = vsub.f32 %v70, %v72
    %v75 = vsub.f32 %v71, %v73
    %v76 = vmax.f32 %v74, 0.0
    %v77 = vmax.f32 %v75, 0.0
    %v78 = vadd.f32 %v76, 1e-05
    %v79 = vadd.f32 %v77, 1e-05
    %v80 = vrsqrt.pop %v78
    %v81 = vrsqrt.pop %v79
    %v82 = vsub.f32 %v50, %v60
    %v83 = vsub.f32 %v51, %v61
    %v84 = vmul.f32 %v82, %v80
    %v85 = vmul.f32 %v83, %v81
    %v86 = vld [vmem:[%s1] sm:$0x1]
    %v88 = vlaneseq
    %v89 = vshrl.u32 %v88, 7
    %v90 = vsub.s32 0, %v89
    %v91 = vrot.slane %v86, %v90
    %v93 = vmul.f32 %v84, %v91
    %v94 = vmul.f32 %v85, %v91
    %v95 = vld [vmem:[%s2] sm:$0x1]
    %v97 = vlaneseq
    %v98 = vshrl.u32 %v97, 7
    %v99 = vsub.s32 0, %v98
    %v100 = vrot.slane %v95, %v99
    %v102 = vadd.f32 %v93, %v100
    %v103 = vadd.f32 %v94, %v100
    %v104 = vpack.c.bf16 %v103, %v102
    %v105 = vld [vmem:[#allocation5] sm:$0xf]
    %v106 = vld [vmem:[#allocation5 + $0x4] sm:$0xf]
    %v107 = vld [vmem:[#allocation5 + $0x8] sm:$0xf]
    %v108 = vld [vmem:[#allocation5 + $0xc] sm:$0xf]
    %v109 = vld [vmem:[#allocation5 + $0x10] sm:$0xf]
    %v110 = vld [vmem:[#allocation5 + $0x14] sm:$0xf]
    %v111 = vld [vmem:[#allocation5 + $0x18] sm:$0xf]
    %v112 = vld [vmem:[#allocation5 + $0x1c] sm:$0xf]
    %v113 = vld [vmem:[%s4] sm:$0x1]
    %v115 = vlaneseq
    %v116 = vshrl.u32 %v115, 7
    %v117 = vsub.s32 0, %v116
    %v118 = vrot.slane %v113, %v117
    %v128 = vunpack.c.l.b16 %v105
    %v129 = vunpack.c.l.b16 %v106
    %v130 = vunpack.c.l.b16 %v107
    %v131 = vunpack.c.l.b16 %v108
    %v132 = vunpack.c.l.b16 %v109
    %v133 = vunpack.c.l.b16 %v110
    %v134 = vunpack.c.l.b16 %v111
    %v135 = vunpack.c.l.b16 %v112
    %v136 = vpack.c.b16 %v129, %v128
    %v137 = vpack.c.b16 %v131, %v130
    %v138 = vpack.c.b16 %v133, %v132
    %v139 = vpack.c.b16 %v135, %v134
    %v145 = vsel %vm52, %v104, 0
    %147 = vmatprep.subr.bf16.mxu0 0
    %148 = vmatpush1.bf16.msra.mxu0 0
    %149 = vmatprep.subr.bf16.mxu0 0
    %150 = vmatpush1.bf16.msra.mxu0 0
    %151 = vmatprep.subr.bf16.mxu0 0
    %152 = vmatpush1.bf16.msra.mxu0 0
    %153 = vmatprep.subr.bf16.mxu0 0
    %154 = vmatpush1.bf16.msra.mxu0 0
    %155 = vmatprep.subr.bf16.mxu0 0
    %156 = vmatpush1.bf16.msra.mxu0 %v139
    %157 = vmatprep.subr.bf16.mxu0 0
    %158 = vmatpush1.bf16.msra.mxu0 %v138
    %159 = vmatprep.subr.bf16.mxu0 0
    %160 = vmatpush1.bf16.msra.mxu0 %v137
    %161 = vmatprep.subr.bf16.mxu0 0
    %162 = vmatpush1.bf16.msra.mxu0 %v136
    %163 = vmatprep.subr.bf16.mxu0 0
    %164 = vmatpush2.bf16.msra.mxu0 0
    %165 = vmatprep.subr.bf16.mxu0 0
    %166 = vmatpush2.bf16.msra.mxu0 0
    %167 = vmatprep.subr.bf16.mxu0 0
    %168 = vmatpush2.bf16.msra.mxu0 0
    %169 = vmatprep.subr.bf16.mxu0 0
    %170 = vmatpush2.bf16.msra.mxu0 0
    %171 = vmatprep.subr.bf16.mxu0 0
    %172 = vmatpush2.bf16.msra.mxu0 0
    %173 = vmatprep.subr.bf16.mxu0 0
    %174 = vmatpush2.bf16.msra.mxu0 0
    %175 = vmatprep.subr.bf16.mxu0 0
    %176 = vmatpush2.bf16.msra.mxu0 0
    %177 = vmatprep.subr.bf16.mxu0 0
    %178 = vmatpush2.bf16.msra.mxu0 0
    %179 = vmatprep.mubr.bf16.mxu0 0
    %180 = vmatmul.mubr.bf16.gmra.mxu0 %v145
    %v181 = vpop.f32.mrf.mxu0
    %v182 = vadd.f32 %v118, %v181
    %v183 = vpop.f32.mrf.mxu0
    %v184 = vpop.f32.mrf.mxu0
    %v185 = vadd.f32 %v118, %v184
    %v186 = vpop.f32.mrf.mxu0
    %187 = vdwg.mxu0
    %188 = vst [vmem:[#allocation7] sm:$0xff] %v182
    %189 = vst [vmem:[#allocation7 + $0x8] sm:$0xff] %v185
    // Predicated region
    $region30: #{prenorm_linear.1} parent=1 // pred_check
      _
    $region31: #{prenorm_linear.1} parent=1 // pred_check_branch
      %191 = sbr.rel (0) target = $region33
    $region32: #{prenorm_linear.1} parent=1 // pred_region
      %s193 = ssub.s32 256, 256
      %194 = vsyncadd [#allocation4], %s193
      %s195 = sshll.u32 [#allocation7], 4
      %s196 = int_to_ptr.vmem [resolvable:$true] %s195
      %201 = dma.vmem_to_hbm [thread:$0]  %s196, 256, %s5, [#allocation4], 128, 128, 8
    $region33: #{prenorm_linear.1} parent=1 // pred_fallthru
      _
    // Predicated region
    $region34: #{prenorm_linear.1} parent=1 // pred_check
      _
    $region35: #{prenorm_linear.1} parent=1 // pred_check_branch
      %203 = sbr.rel (0) target = $region37
    $region36: #{prenorm_linear.1} parent=1 // pred_region
      %204 = dma.done [#allocation4], 256
    $region37: #{prenorm_linear.1} parent=1 // pred_fallthru
      _
    %205 = vsyncpa [#allocation3], 1
    %206 = vsyncpa [#allocation6], 1
    %207 = vsyncpa [#allocation4], 1

</llo_original>
